<compile_context>
chip_gen: v5e
topology: v5e:2x2
jax: 0.10.0
libtpu: 0.0.40
codegen_flags: <defaults>
</compile_context>

<pallas_src>
import jax
import jax.numpy as jnp
import numpy as np
from jax.experimental import pallas as pl
from jax.experimental.pallas import tpu as pltpu

NUM_DIRECTION = 32


def _erf(x):
    # Abramowitz & Stegun 7.1.26 polynomial erf (|err| <= 1.5e-7, ~f32 exact).
    a1, a2, a3, a4, a5 = (0.254829592, -0.284496736, 1.421413741,
                          -1.453152027, 1.061405429)
    p = 0.3275911
    ax = jnp.abs(x)
    t = 1.0 / (1.0 + p * ax)
    poly = ((((a5 * t + a4) * t + a3) * t + a2) * t + a1) * t
    y = 1.0 - poly * jnp.exp(-ax * ax)
    return jnp.where(x < 0.0, -y, y)


def _gelu_exact(x):
    # nn.GELU() default (exact, erf-based)
    return 0.5 * x * (1.0 + _erf(x * 0.7071067811865476))


def directional_encoding_kernel(dp_ref, vec_ref, w1_ref, shift_ref,
                                w2_ref, b2_ref, o_ref):
    # dp_ref block: (1, 3, K, TN)   (N on lanes, K on sublanes -> dense vregs)
    # o_ref  block: (1, C_out, TN)
    K = dp_ref.shape[2]
    vec = vec_ref[...]                                   # (32, 3), pre-normalized
    v0, v1, v2 = vec[:, 0:1], vec[:, 1:2], vec[:, 2:3]   # (32, 1)

    # theta[m, n] = max_k sum_c vec[m, c] * dp_norm[c, n, k]
    # Static unroll over small K; per-k work is pure 2D VPU/EUP ops, so the
    # working set stays a few dozen vregs and the MXU slot is left free.
    theta_max = None
    for k in range(K):
        d = dp_ref[0, :, k, :].astype(jnp.float32)       # (3, TN)
        x, y, z = d[0:1, :], d[1:2, :], d[2:3, :]        # (1, TN) each
        # F.normalize(dp, dim=1): x / max(|x|, 1e-12)  ==  x * rsqrt(max(|x|^2, 1e-24))
        inv = jax.lax.rsqrt(jnp.maximum(x * x + y * y + z * z, 1e-24))
        xn, yn, zn = x * inv, y * inv, z * inv
        t = v0 * xn + v1 * yn + v2 * zn                  # (32, TN) broadcast-FMAs
        theta_max = t if theta_max is None else jnp.maximum(theta_max, t)

    # Conv1d(32 -> hid, k=1, no bias) with BN scale pre-folded into w1.
    h = jnp.dot(w1_ref[...], theta_max, preferred_element_type=jnp.float32)
    h = h + shift_ref[...]                               # BN shift
    h = _gelu_exact(h)
    # Conv1d(hid -> out, k=1, bias)
    out = jnp.dot(w2_ref[...], h, preferred_element_type=jnp.float32)
    out = out + b2_ref[...]
    o_ref[0] = out.astype(o_ref.dtype)


def _pick_tile_n(N, K):
    """Largest lane-dense N tile whose double-buffered dp block stays <= ~4 MiB
    (comfortably under v5e's 16 MiB default scoped VMEM and v7x's 64 MiB)."""
    budget = 4 * 1024 * 1024
    for tn in (1024, 512, 256, 128):
        if N % tn == 0 and 2 * 3 * K * tn * 4 <= budget:
            return tn
    return N  # small or irregular N: single tile (block == full dim is legal)


def directional_encoding_kn(dp_kn, params):
    """Fast path: dp already in (B, 3, K, N) layout -> no transpose anywhere."""
    B, C, K, N = dp_kn.shape
    assert C == 3
    vec = params["dir_vectors"]
    w1, w2, b2 = params["w1"], params["w2"], params["b2"]
    gamma, beta = params["bn_gamma"], params["bn_beta"]
    rmean, rvar = params["bn_mean"], params["bn_var"]
    hid, out_ch = w1.shape[0], w2.shape[0]
    eps = 1e-5

    # -------- one-time parameter glue (outside the hot path) --------
    vec_n = (vec / jnp.maximum(
        jnp.sqrt(jnp.sum(vec * vec, axis=1, keepdims=True)), 1e-12)
             ).astype(jnp.float32)
    scale = gamma / jnp.sqrt(rvar + eps)                          # (hid,)
    w1f = (scale[:, None] * w1).astype(jnp.float32)               # BN scale folded
    shift = ((beta - rmean * scale)[:, None]).astype(jnp.float32) # (hid, 1)
    b2c = b2[:, None].astype(jnp.float32)                         # (out_ch, 1)

    tn = _pick_tile_n(N, K)
    grid = (B, N // tn)

    cost = pl.CostEstimate(
        flops=int(B * N * (K * (32 * 5 + 44)
                           + 2 * 32 * hid + 2 * hid * out_ch + 12 * hid)),
        transcendentals=int(B * N * (K + hid)),          # rsqrt + exp(erf)
        bytes_accessed=int(4 * (dp_kn.size + B * out_ch * N
                                + vec.size + w1.size + w2.size
                                + 2 * hid + out_ch)),
    )

    return pl.pallas_call(
        directional_encoding_kernel,
        out_shape=jax.ShapeDtypeStruct((B, out_ch, N), jnp.float32),
        grid=grid,
        in_specs=[
            pl.BlockSpec((1, 3, K, tn), lambda b, n: (b, 0, 0, n)),
            pl.BlockSpec((NUM_DIRECTION, 3), lambda b, n: (0, 0)),
            pl.BlockSpec((hid, NUM_DIRECTION), lambda b, n: (0, 0)),
            pl.BlockSpec((hid, 1), lambda b, n: (0, 0)),
            pl.BlockSpec((out_ch, hid), lambda b, n: (0, 0)),
            pl.BlockSpec((out_ch, 1), lambda b, n: (0, 0)),
        ],
        out_specs=pl.BlockSpec((1, out_ch, tn), lambda b, n: (b, 0, n)),
        compiler_params=pltpu.CompilerParams(
            dimension_semantics=("parallel", "parallel"),
            vmem_limit_bytes=32 * 1024 * 1024,
        ),
        cost_estimate=cost,
    )(dp_kn, vec_n, w1f, shift, w2.astype(jnp.float32), b2c)


def directional_encoding(dp, params, f0=None, idx=None):
    """PyTorch-layout entry point: dp (B, 3, N, K) float.  Returns f: (B, out, N).

    One XLA transpose brings dp to (B, 3, K, N) so the kernel sees points on
    the lane axis; producers that can emit (B, 3, K, N) should call
    directional_encoding_kn directly and skip this extra HBM pass.
    """
    del f0, idx  # unused by the reference forward
    dp_kn = jnp.transpose(dp, (0, 1, 3, 2))
    return directional_encoding_kn(dp_kn, params)


def reference(dp, params):
    """Pure-JAX reference mirroring the PyTorch forward (BN in eval mode)."""
    eps = 1e-5
    vec = params["dir_vectors"]
    dp_n = dp / jnp.maximum(
        jnp.sqrt(jnp.sum(dp * dp, axis=1, keepdims=True)), 1e-12)
    vec_n = vec / jnp.maximum(
        jnp.sqrt(jnp.sum(vec * vec, axis=1, keepdims=True)), 1e-12)
    theta = jnp.einsum("md,bdnk->bmnk", vec_n, dp_n)
    theta_max = theta.max(axis=-1)                              # (B, 32, N)
    h = jnp.einsum("om,bmn->bon", params["w1"], theta_max)
    h = ((h - params["bn_mean"][None, :, None])
         / jnp.sqrt(params["bn_var"][None, :, None] + eps)
         * params["bn_gamma"][None, :, None]
         + params["bn_beta"][None, :, None])
    h = 0.5 * h * (1.0 + jax.scipy.special.erf(h / jnp.sqrt(2.0)))
    return (jnp.einsum("oh,bhn->bon", params["w2"], h)
            + params["b2"][None, :, None])


if __name__ == "__main__":
    def make_params(key, out_channels):
        hid = out_channels // 2
        ks = jax.random.split(key, 8)
        return {
            "dir_vectors": jax.random.normal(ks[0], (NUM_DIRECTION, 3), jnp.float32),
            "w1": 0.1 * jax.random.normal(ks[1], (hid, NUM_DIRECTION), jnp.float32),
            "bn_gamma": 1.0 + 0.1 * jax.random.normal(ks[2], (hid,), jnp.float32),
            "bn_beta": 0.1 * jax.random.normal(ks[3], (hid,), jnp.float32),
            "bn_mean": 0.1 * jax.random.normal(ks[4], (hid,), jnp.float32),
            "bn_var": jnp.abs(jax.random.normal(ks[5], (hid,), jnp.float32)) + 0.5,
            "w2": 0.1 * jax.random.normal(ks[6], (out_channels, hid), jnp.float32),
            "b2": 0.1 * jax.random.normal(ks[7], (out_channels,), jnp.float32),
        }

    key = jax.random.PRNGKey(0)
    k1, k2, k3, k4 = jax.random.split(key, 4)

    # Case 1: small canonical shapes, dp (B, C=3, N, K) = (2, 3, 16, 8), out=32.
    dp1 = jax.random.normal(k1, (2, 3, 16, 8), jnp.float32)
    p1 = make_params(k2, 32)
    f1 = directional_encoding(dp1, p1)
    jax.block_until_ready(f1)
    np.testing.assert_allclose(np.asarray(f1), np.asarray(reference(dp1, p1)),
                               rtol=2e-4, atol=2e-5)

    # Case 2: exercises the N-tiled parallel grid (TN=1024 -> grid (2, 2)).
    dp2 = jax.random.normal(k3, (2, 3, 2048, 8), jnp.float32)
    p2 = make_params(k4, 64)
    f2 = directional_encoding(dp2, p2)
    jax.block_until_ready(f2)
    np.testing.assert_allclose(np.asarray(f2), np.asarray(reference(dp2, p2)),
                               rtol=2e-4, atol=2e-5)

    print("KERNEL_OK")
</pallas_src>

<mosaic_0001>
module attributes {stable_mosaic.version = 11 : i64} {
  func.func @directional_encoding_kernel(%arg0: i32, %arg1: i32, %arg2: memref<1x3x8x16xf32, #tpu.memory_space<vmem>>, %arg3: memref<32x3xf32, #tpu.memory_space<vmem>>, %arg4: memref<16x32xf32, #tpu.memory_space<vmem>>, %arg5: memref<16x1xf32, #tpu.memory_space<vmem>>, %arg6: memref<32x16xf32, #tpu.memory_space<vmem>>, %arg7: memref<32x1xf32, #tpu.memory_space<vmem>>, %arg8: memref<1x32x16xf32, #tpu.memory_space<vmem>>) attributes {dimension_semantics = [#tpu.dimension_semantics<parallel>, #tpu.dimension_semantics<parallel>], iteration_bounds = array<i64: 2, 1>, scalar_prefetch = 0 : i64, scratch_operands = 0 : i64, tpu.core_type = #tpu.core_type<tc>, window_params = [{transform_indices = @transform_0, window_bounds = array<i64: 1, 3, 8, 16>}, {pipeline_mode = #tpu.pipeline_mode<synchronous>, transform_indices = @transform_1, window_bounds = array<i64: 32, 3>}, {pipeline_mode = #tpu.pipeline_mode<synchronous>, transform_indices = @transform_2, window_bounds = array<i64: 16, 32>}, {pipeline_mode = #tpu.pipeline_mode<synchronous>, transform_indices = @transform_3, window_bounds = array<i64: 16, 1>}, {pipeline_mode = #tpu.pipeline_mode<synchronous>, transform_indices = @transform_4, window_bounds = array<i64: 32, 16>}, {pipeline_mode = #tpu.pipeline_mode<synchronous>, transform_indices = @transform_5, window_bounds = array<i64: 32, 1>}, {transform_indices = @transform_6, window_bounds = array<i64: 1, 32, 16>}]} {
    %c0 = arith.constant 0 : index
    %c0_0 = arith.constant 0 : index
    %0 = vector.load %arg3[%c0, %c0_0] : memref<32x3xf32, #tpu.memory_space<vmem>>, vector<32x3xf32>
    %1 = vector.extract_strided_slice %0 {offsets = [0, 0], sizes = [32, 1], strides = [1, 1]} : vector<32x3xf32> to vector<32x1xf32>
    %2 = vector.extract_strided_slice %0 {offsets = [0, 1], sizes = [32, 1], strides = [1, 1]} : vector<32x3xf32> to vector<32x1xf32>
    %3 = vector.extract_strided_slice %0 {offsets = [0, 2], sizes = [32, 1], strides = [1, 1]} : vector<32x3xf32> to vector<32x1xf32>
    %c0_1 = arith.constant 0 : index
    %c0_2 = arith.constant 0 : index
    %c0_3 = arith.constant 0 : index
    %c0_4 = arith.constant 0 : index
    %4 = vector.load %arg2[%c0_1, %c0_2, %c0_3, %c0_4] : memref<1x3x8x16xf32, #tpu.memory_space<vmem>>, vector<1x3x1x16xf32>
    %5 = vector.shape_cast %4 : vector<1x3x1x16xf32> to vector<3x16xf32>
    %6 = vector.extract_strided_slice %5 {offsets = [0, 0], sizes = [1, 16], strides = [1, 1]} : vector<3x16xf32> to vector<1x16xf32>
    %7 = vector.extract_strided_slice %5 {offsets = [1, 0], sizes = [1, 16], strides = [1, 1]} : vector<3x16xf32> to vector<1x16xf32>
    %8 = vector.extract_strided_slice %5 {offsets = [2, 0], sizes = [1, 16], strides = [1, 1]} : vector<3x16xf32> to vector<1x16xf32>
    %9 = arith.mulf %6, %6 : vector<1x16xf32>
    %10 = arith.mulf %7, %7 : vector<1x16xf32>
    %11 = arith.addf %9, %10 : vector<1x16xf32>
    %12 = arith.mulf %8, %8 : vector<1x16xf32>
    %13 = arith.addf %11, %12 : vector<1x16xf32>
    %cst = arith.constant 1.000000e-24 : f32
    %14 = vector.broadcast %cst : f32 to vector<1x16xf32>
    %15 = arith.maximumf %13, %14 : vector<1x16xf32>
    %16 = math.rsqrt %15 : vector<1x16xf32>
    %17 = arith.mulf %6, %16 : vector<1x16xf32>
    %18 = arith.mulf %7, %16 : vector<1x16xf32>
    %19 = arith.mulf %8, %16 : vector<1x16xf32>
    %20 = vector.broadcast %1 : vector<32x1xf32> to vector<32x16xf32>
    %21 = vector.broadcast %17 : vector<1x16xf32> to vector<32x16xf32>
    %22 = arith.mulf %20, %21 : vector<32x16xf32>
    %23 = vector.broadcast %2 : vector<32x1xf32> to vector<32x16xf32>
    %24 = vector.broadcast %18 : vector<1x16xf32> to vector<32x16xf32>
    %25 = arith.mulf %23, %24 : vector<32x16xf32>
    %26 = arith.addf %22, %25 : vector<32x16xf32>
    %27 = vector.broadcast %3 : vector<32x1xf32> to vector<32x16xf32>
    %28 = vector.broadcast %19 : vector<1x16xf32> to vector<32x16xf32>
    %29 = arith.mulf %27, %28 : vector<32x16xf32>
    %30 = arith.addf %26, %29 : vector<32x16xf32>
    %c0_5 = arith.constant 0 : index
    %c0_6 = arith.constant 0 : index
    %c1 = arith.constant 1 : index
    %c0_7 = arith.constant 0 : index
    %31 = vector.load %arg2[%c0_5, %c0_6, %c1, %c0_7] : memref<1x3x8x16xf32, #tpu.memory_space<vmem>>, vector<1x3x1x16xf32>
    %32 = vector.shape_cast %31 : vector<1x3x1x16xf32> to vector<3x16xf32>
    %33 = vector.extract_strided_slice %32 {offsets = [0, 0], sizes = [1, 16], strides = [1, 1]} : vector<3x16xf32> to vector<1x16xf32>
    %34 = vector.extract_strided_slice %32 {offsets = [1, 0], sizes = [1, 16], strides = [1, 1]} : vector<3x16xf32> to vector<1x16xf32>
    %35 = vector.extract_strided_slice %32 {offsets = [2, 0], sizes = [1, 16], strides = [1, 1]} : vector<3x16xf32> to vector<1x16xf32>
    %36 = arith.mulf %33, %33 : vector<1x16xf32>
    %37 = arith.mulf %34, %34 : vector<1x16xf32>
    %38 = arith.addf %36, %37 : vector<1x16xf32>
    %39 = arith.mulf %35, %35 : vector<1x16xf32>
    %40 = arith.addf %38, %39 : vector<1x16xf32>
    %cst_8 = arith.constant 1.000000e-24 : f32
    %41 = vector.broadcast %cst_8 : f32 to vector<1x16xf32>
    %42 = arith.maximumf %40, %41 : vector<1x16xf32>
    %43 = math.rsqrt %42 : vector<1x16xf32>
    %44 = arith.mulf %33, %43 : vector<1x16xf32>
    %45 = arith.mulf %34, %43 : vector<1x16xf32>
    %46 = arith.mulf %35, %43 : vector<1x16xf32>
    %47 = vector.broadcast %1 : vector<32x1xf32> to vector<32x16xf32>
    %48 = vector.broadcast %44 : vector<1x16xf32> to vector<32x16xf32>
    %49 = arith.mulf %47, %48 : vector<32x16xf32>
    %50 = vector.broadcast %2 : vector<32x1xf32> to vector<32x16xf32>
    %51 = vector.broadcast %45 : vector<1x16xf32> to vector<32x16xf32>
    %52 = arith.mulf %50, %51 : vector<32x16xf32>
    %53 = arith.addf %49, %52 : vector<32x16xf32>
    %54 = vector.broadcast %3 : vector<32x1xf32> to vector<32x16xf32>
    %55 = vector.broadcast %46 : vector<1x16xf32> to vector<32x16xf32>
    %56 = arith.mulf %54, %55 : vector<32x16xf32>
    %57 = arith.addf %53, %56 : vector<32x16xf32>
    %58 = arith.maximumf %30, %57 : vector<32x16xf32>
    %c0_9 = arith.constant 0 : index
    %c0_10 = arith.constant 0 : index
    %c2 = arith.constant 2 : index
    %c0_11 = arith.constant 0 : index
    %59 = vector.load %arg2[%c0_9, %c0_10, %c2, %c0_11] : memref<1x3x8x16xf32, #tpu.memory_space<vmem>>, vector<1x3x1x16xf32>
    %60 = vector.shape_cast %59 : vector<1x3x1x16xf32> to vector<3x16xf32>
    %61 = vector.extract_strided_slice %60 {offsets = [0, 0], sizes = [1, 16], strides = [1, 1]} : vector<3x16xf32> to vector<1x16xf32>
    %62 = vector.extract_strided_slice %60 {offsets = [1, 0], sizes = [1, 16], strides = [1, 1]} : vector<3x16xf32> to vector<1x16xf32>
    %63 = vector.extract_strided_slice %60 {offsets = [2, 0], sizes = [1, 16], strides = [1, 1]} : vector<3x16xf32> to vector<1x16xf32>
    %64 = arith.mulf %61, %61 : vector<1x16xf32>
    %65 = arith.mulf %62, %62 : vector<1x16xf32>
    %66 = arith.addf %64, %65 : vector<1x16xf32>
    %67 = arith.mulf %63, %63 : vector<1x16xf32>
    %68 = arith.addf %66, %67 : vector<1x16xf32>
    %cst_12 = arith.constant 1.000000e-24 : f32
    %69 = vector.broadcast %cst_12 : f32 to vector<1x16xf32>
    %70 = arith.maximumf %68, %69 : vector<1x16xf32>
    %71 = math.rsqrt %70 : vector<1x16xf32>
    %72 = arith.mulf %61, %71 : vector<1x16xf32>
    %73 = arith.mulf %62, %71 : vector<1x16xf32>
    %74 = arith.mulf %63, %71 : vector<1x16xf32>
    %75 = vector.broadcast %1 : vector<32x1xf32> to vector<32x16xf32>
    %76 = vector.broadcast %72 : vector<1x16xf32> to vector<32x16xf32>
    %77 = arith.mulf %75, %76 : vector<32x16xf32>
    %78 = vector.broadcast %2 : vector<32x1xf32> to vector<32x16xf32>
    %79 = vector.broadcast %73 : vector<1x16xf32> to vector<32x16xf32>
    %80 = arith.mulf %78, %79 : vector<32x16xf32>
    %81 = arith.addf %77, %80 : vector<32x16xf32>
    %82 = vector.broadcast %3 : vector<32x1xf32> to vector<32x16xf32>
    %83 = vector.broadcast %74 : vector<1x16xf32> to vector<32x16xf32>
    %84 = arith.mulf %82, %83 : vector<32x16xf32>
    %85 = arith.addf %81, %84 : vector<32x16xf32>
    %86 = arith.maximumf %58, %85 : vector<32x16xf32>
    %c0_13 = arith.constant 0 : index
    %c0_14 = arith.constant 0 : index
    %c3 = arith.constant 3 : index
    %c0_15 = arith.constant 0 : index
    %87 = vector.load %arg2[%c0_13, %c0_14, %c3, %c0_15] : memref<1x3x8x16xf32, #tpu.memory_space<vmem>>, vector<1x3x1x16xf32>
    %88 = vector.shape_cast %87 : vector<1x3x1x16xf32> to vector<3x16xf32>
    %89 = vector.extract_strided_slice %88 {offsets = [0, 0], sizes = [1, 16], strides = [1, 1]} : vector<3x16xf32> to vector<1x16xf32>
    %90 = vector.extract_strided_slice %88 {offsets = [1, 0], sizes = [1, 16], strides = [1, 1]} : vector<3x16xf32> to vector<1x16xf32>
    %91 = vector.extract_strided_slice %88 {offsets = [2, 0], sizes = [1, 16], strides = [1, 1]} : vector<3x16xf32> to vector<1x16xf32>
    %92 = arith.mulf %89, %89 : vector<1x16xf32>
    %93 = arith.mulf %90, %90 : vector<1x16xf32>
    %94 = arith.addf %92, %93 : vector<1x16xf32>
    %95 = arith.mulf %91, %91 : vector<1x16xf32>
    %96 = arith.addf %94, %95 : vector<1x16xf32>
    %cst_16 = arith.constant 1.000000e-24 : f32
    %97 = vector.broadcast %cst_16 : f32 to vector<1x16xf32>
    %98 = arith.maximumf %96, %97 : vector<1x16xf32>
    %99 = math.rsqrt %98 : vector<1x16xf32>
    %100 = arith.mulf %89, %99 : vector<1x16xf32>
    %101 = arith.mulf %90, %99 : vector<1x16xf32>
    %102 = arith.mulf %91, %99 : vector<1x16xf32>
    %103 = vector.broadcast %1 : vector<32x1xf32> to vector<32x16xf32>
    %104 = vector.broadcast %100 : vector<1x16xf32> to vector<32x16xf32>
    %105 = arith.mulf %103, %104 : vector<32x16xf32>
    %106 = vector.broadcast %2 : vector<32x1xf32> to vector<32x16xf32>
    %107 = vector.broadcast %101 : vector<1x16xf32> to vector<32x16xf32>
    %108 = arith.mulf %106, %107 : vector<32x16xf32>
    %109 = arith.addf %105, %108 : vector<32x16xf32>
    %110 = vector.broadcast %3 : vector<32x1xf32> to vector<32x16xf32>
    %111 = vector.broadcast %102 : vector<1x16xf32> to vector<32x16xf32>
    %112 = arith.mulf %110, %111 : vector<32x16xf32>
    %113 = arith.addf %109, %112 : vector<32x16xf32>
    %114 = arith.maximumf %86, %113 : vector<32x16xf32>
    %c0_17 = arith.constant 0 : index
    %c0_18 = arith.constant 0 : index
    %c4 = arith.constant 4 : index
    %c0_19 = arith.constant 0 : index
    %115 = vector.load %arg2[%c0_17, %c0_18, %c4, %c0_19] : memref<1x3x8x16xf32, #tpu.memory_space<vmem>>, vector<1x3x1x16xf32>
    %116 = vector.shape_cast %115 : vector<1x3x1x16xf32> to vector<3x16xf32>
    %117 = vector.extract_strided_slice %116 {offsets = [0, 0], sizes = [1, 16], strides = [1, 1]} : vector<3x16xf32> to vector<1x16xf32>
    %118 = vector.extract_strided_slice %116 {offsets = [1, 0], sizes = [1, 16], strides = [1, 1]} : vector<3x16xf32> to vector<1x16xf32>
    %119 = vector.extract_strided_slice %116 {offsets = [2, 0], sizes = [1, 16], strides = [1, 1]} : vector<3x16xf32> to vector<1x16xf32>
    %120 = arith.mulf %117, %117 : vector<1x16xf32>
    %121 = arith.mulf %118, %118 : vector<1x16xf32>
    %122 = arith.addf %120, %121 : vector<1x16xf32>
    %123 = arith.mulf %119, %119 : vector<1x16xf32>
    %124 = arith.addf %122, %123 : vector<1x16xf32>
    %cst_20 = arith.constant 1.000000e-24 : f32
    %125 = vector.broadcast %cst_20 : f32 to vector<1x16xf32>
    %126 = arith.maximumf %124, %125 : vector<1x16xf32>
    %127 = math.rsqrt %126 : vector<1x16xf32>
    %128 = arith.mulf %117, %127 : vector<1x16xf32>
    %129 = arith.mulf %118, %127 : vector<1x16xf32>
    %130 = arith.mulf %119, %127 : vector<1x16xf32>
    %131 = vector.broadcast %1 : vector<32x1xf32> to vector<32x16xf32>
    %132 = vector.broadcast %128 : vector<1x16xf32> to vector<32x16xf32>
    %133 = arith.mulf %131, %132 : vector<32x16xf32>
    %134 = vector.broadcast %2 : vector<32x1xf32> to vector<32x16xf32>
    %135 = vector.broadcast %129 : vector<1x16xf32> to vector<32x16xf32>
    %136 = arith.mulf %134, %135 : vector<32x16xf32>
    %137 = arith.addf %133, %136 : vector<32x16xf32>
    %138 = vector.broadcast %3 : vector<32x1xf32> to vector<32x16xf32>
    %139 = vector.broadcast %130 : vector<1x16xf32> to vector<32x16xf32>
    %140 = arith.mulf %138, %139 : vector<32x16xf32>
    %141 = arith.addf %137, %140 : vector<32x16xf32>
    %142 = arith.maximumf %114, %141 : vector<32x16xf32>
    %c0_21 = arith.constant 0 : index
    %c0_22 = arith.constant 0 : index
    %c5 = arith.constant 5 : index
    %c0_23 = arith.constant 0 : index
    %143 = vector.load %arg2[%c0_21, %c0_22, %c5, %c0_23] : memref<1x3x8x16xf32, #tpu.memory_space<vmem>>, vector<1x3x1x16xf32>
    %144 = vector.shape_cast %143 : vector<1x3x1x16xf32> to vector<3x16xf32>
    %145 = vector.extract_strided_slice %144 {offsets = [0, 0], sizes = [1, 16], strides = [1, 1]} : vector<3x16xf32> to vector<1x16xf32>
    %146 = vector.extract_strided_slice %144 {offsets = [1, 0], sizes = [1, 16], strides = [1, 1]} : vector<3x16xf32> to vector<1x16xf32>
    %147 = vector.extract_strided_slice %144 {offsets = [2, 0], sizes = [1, 16], strides = [1, 1]} : vector<3x16xf32> to vector<1x16xf32>
    %148 = arith.mulf %145, %145 : vector<1x16xf32>
    %149 = arith.mulf %146, %146 : vector<1x16xf32>
    %150 = arith.addf %148, %149 : vector<1x16xf32>
    %151 = arith.mulf %147, %147 : vector<1x16xf32>
    %152 = arith.addf %150, %151 : vector<1x16xf32>
    %cst_24 = arith.constant 1.000000e-24 : f32
    %153 = vector.broadcast %cst_24 : f32 to vector<1x16xf32>
    %154 = arith.maximumf %152, %153 : vector<1x16xf32>
    %155 = math.rsqrt %154 : vector<1x16xf32>
    %156 = arith.mulf %145, %155 : vector<1x16xf32>
    %157 = arith.mulf %146, %155 : vector<1x16xf32>
    %158 = arith.mulf %147, %155 : vector<1x16xf32>
    %159 = vector.broadcast %1 : vector<32x1xf32> to vector<32x16xf32>
    %160 = vector.broadcast %156 : vector<1x16xf32> to vector<32x16xf32>
    %161 = arith.mulf %159, %160 : vector<32x16xf32>
    %162 = vector.broadcast %2 : vector<32x1xf32> to vector<32x16xf32>
    %163 = vector.broadcast %157 : vector<1x16xf32> to vector<32x16xf32>
    %164 = arith.mulf %162, %163 : vector<32x16xf32>
    %165 = arith.addf %161, %164 : vector<32x16xf32>
    %166 = vector.broadcast %3 : vector<32x1xf32> to vector<32x16xf32>
    %167 = vector.broadcast %158 : vector<1x16xf32> to vector<32x16xf32>
    %168 = arith.mulf %166, %167 : vector<32x16xf32>
    %169 = arith.addf %165, %168 : vector<32x16xf32>
    %170 = arith.maximumf %142, %169 : vector<32x16xf32>
    %c0_25 = arith.constant 0 : index
    %c0_26 = arith.constant 0 : index
    %c6 = arith.constant 6 : index
    %c0_27 = arith.constant 0 : index
    %171 = vector.load %arg2[%c0_25, %c0_26, %c6, %c0_27] : memref<1x3x8x16xf32, #tpu.memory_space<vmem>>, vector<1x3x1x16xf32>
    %172 = vector.shape_cast %171 : vector<1x3x1x16xf32> to vector<3x16xf32>
    %173 = vector.extract_strided_slice %172 {offsets = [0, 0], sizes = [1, 16], strides = [1, 1]} : vector<3x16xf32> to vector<1x16xf32>
    %174 = vector.extract_strided_slice %172 {offsets = [1, 0], sizes = [1, 16], strides = [1, 1]} : vector<3x16xf32> to vector<1x16xf32>
    %175 = vector.extract_strided_slice %172 {offsets = [2, 0], sizes = [1, 16], strides = [1, 1]} : vector<3x16xf32> to vector<1x16xf32>
    %176 = arith.mulf %173, %173 : vector<1x16xf32>
    %177 = arith.mulf %174, %174 : vector<1x16xf32>
    %178 = arith.addf %176, %177 : vector<1x16xf32>
    %179 = arith.mulf %175, %175 : vector<1x16xf32>
    %180 = arith.addf %178, %179 : vector<1x16xf32>
    %cst_28 = arith.constant 1.000000e-24 : f32
    %181 = vector.broadcast %cst_28 : f32 to vector<1x16xf32>
    %182 = arith.maximumf %180, %181 : vector<1x16xf32>
    %183 = math.rsqrt %182 : vector<1x16xf32>
    %184 = arith.mulf %173, %183 : vector<1x16xf32>
    %185 = arith.mulf %174, %183 : vector<1x16xf32>
    %186 = arith.mulf %175, %183 : vector<1x16xf32>
    %187 = vector.broadcast %1 : vector<32x1xf32> to vector<32x16xf32>
    %188 = vector.broadcast %184 : vector<1x16xf32> to vector<32x16xf32>
    %189 = arith.mulf %187, %188 : vector<32x16xf32>
    %190 = vector.broadcast %2 : vector<32x1xf32> to vector<32x16xf32>
    %191 = vector.broadcast %185 : vector<1x16xf32> to vector<32x16xf32>
    %192 = arith.mulf %190, %191 : vector<32x16xf32>
    %193 = arith.addf %189, %192 : vector<32x16xf32>
    %194 = vector.broadcast %3 : vector<32x1xf32> to vector<32x16xf32>
    %195 = vector.broadcast %186 : vector<1x16xf32> to vector<32x16xf32>
    %196 = arith.mulf %194, %195 : vector<32x16xf32>
    %197 = arith.addf %193, %196 : vector<32x16xf32>
    %198 = arith.maximumf %170, %197 : vector<32x16xf32>
    %c0_29 = arith.constant 0 : index
    %c0_30 = arith.constant 0 : index
    %c7 = arith.constant 7 : index
    %c0_31 = arith.constant 0 : index
    %199 = vector.load %arg2[%c0_29, %c0_30, %c7, %c0_31] : memref<1x3x8x16xf32, #tpu.memory_space<vmem>>, vector<1x3x1x16xf32>
    %200 = vector.shape_cast %199 : vector<1x3x1x16xf32> to vector<3x16xf32>
    %201 = vector.extract_strided_slice %200 {offsets = [0, 0], sizes = [1, 16], strides = [1, 1]} : vector<3x16xf32> to vector<1x16xf32>
    %202 = vector.extract_strided_slice %200 {offsets = [1, 0], sizes = [1, 16], strides = [1, 1]} : vector<3x16xf32> to vector<1x16xf32>
    %203 = vector.extract_strided_slice %200 {offsets = [2, 0], sizes = [1, 16], strides = [1, 1]} : vector<3x16xf32> to vector<1x16xf32>
    %204 = arith.mulf %201, %201 : vector<1x16xf32>
    %205 = arith.mulf %202, %202 : vector<1x16xf32>
    %206 = arith.addf %204, %205 : vector<1x16xf32>
    %207 = arith.mulf %203, %203 : vector<1x16xf32>
    %208 = arith.addf %206, %207 : vector<1x16xf32>
    %cst_32 = arith.constant 1.000000e-24 : f32
    %209 = vector.broadcast %cst_32 : f32 to vector<1x16xf32>
    %210 = arith.maximumf %208, %209 : vector<1x16xf32>
    %211 = math.rsqrt %210 : vector<1x16xf32>
    %212 = arith.mulf %201, %211 : vector<1x16xf32>
    %213 = arith.mulf %202, %211 : vector<1x16xf32>
    %214 = arith.mulf %203, %211 : vector<1x16xf32>
    %215 = vector.broadcast %1 : vector<32x1xf32> to vector<32x16xf32>
    %216 = vector.broadcast %212 : vector<1x16xf32> to vector<32x16xf32>
    %217 = arith.mulf %215, %216 : vector<32x16xf32>
    %218 = vector.broadcast %2 : vector<32x1xf32> to vector<32x16xf32>
    %219 = vector.broadcast %213 : vector<1x16xf32> to vector<32x16xf32>
    %220 = arith.mulf %218, %219 : vector<32x16xf32>
    %221 = arith.addf %217, %220 : vector<32x16xf32>
    %222 = vector.broadcast %3 : vector<32x1xf32> to vector<32x16xf32>
    %223 = vector.broadcast %214 : vector<1x16xf32> to vector<32x16xf32>
    %224 = arith.mulf %222, %223 : vector<32x16xf32>
    %225 = arith.addf %221, %224 : vector<32x16xf32>
    %226 = arith.maximumf %198, %225 : vector<32x16xf32>
    %c0_33 = arith.constant 0 : index
    %c0_34 = arith.constant 0 : index
    %227 = vector.load %arg4[%c0_33, %c0_34] : memref<16x32xf32, #tpu.memory_space<vmem>>, vector<16x32xf32>
    %cst_35 = arith.constant dense<0.000000e+00> : vector<16x16xf32>
    %228 = tpu.matmul %227, %226, %cst_35 {dimension_numbers = #tpu.dot_dimension_numbers<[1], [0], [0], [1], [0, 0, 1, 1], [], []>} : vector<16x32xf32>, vector<32x16xf32>, vector<16x16xf32> -> vector<16x16xf32>
    %c0_36 = arith.constant 0 : index
    %c0_37 = arith.constant 0 : index
    %229 = vector.load %arg5[%c0_36, %c0_37] : memref<16x1xf32, #tpu.memory_space<vmem>>, vector<16x1xf32>
    %230 = vector.broadcast %229 : vector<16x1xf32> to vector<16x16xf32>
    %231 = arith.addf %228, %230 : vector<16x16xf32>
    %cst_38 = arith.constant 5.000000e-01 : f32
    %232 = vector.broadcast %cst_38 : f32 to vector<16x16xf32>
    %233 = arith.mulf %232, %231 : vector<16x16xf32>
    %cst_39 = arith.constant 0.707106769 : f32
    %234 = vector.broadcast %cst_39 : f32 to vector<16x16xf32>
    %235 = arith.mulf %231, %234 : vector<16x16xf32>
    %236 = math.absf %235 : vector<16x16xf32>
    %cst_40 = arith.constant 0.327591091 : f32
    %237 = vector.broadcast %cst_40 : f32 to vector<16x16xf32>
    %238 = arith.mulf %237, %236 : vector<16x16xf32>
    %cst_41 = arith.constant 1.000000e+00 : f32
    %239 = vector.broadcast %cst_41 : f32 to vector<16x16xf32>
    %240 = arith.addf %239, %238 : vector<16x16xf32>
    %cst_42 = arith.constant 1.000000e+00 : f32
    %241 = vector.broadcast %cst_42 : f32 to vector<16x16xf32>
    %242 = arith.divf %241, %240 : vector<16x16xf32>
    %cst_43 = arith.constant 1.06140542 : f32
    %243 = vector.broadcast %cst_43 : f32 to vector<16x16xf32>
    %244 = arith.mulf %243, %242 : vector<16x16xf32>
    %cst_44 = arith.constant -1.45315206 : f32
    %245 = vector.broadcast %cst_44 : f32 to vector<16x16xf32>
    %246 = arith.addf %244, %245 : vector<16x16xf32>
    %247 = arith.mulf %246, %242 : vector<16x16xf32>
    %cst_45 = arith.constant 1.42141378 : f32
    %248 = vector.broadcast %cst_45 : f32 to vector<16x16xf32>
    %249 = arith.addf %247, %248 : vector<16x16xf32>
    %250 = arith.mulf %249, %242 : vector<16x16xf32>
    %cst_46 = arith.constant -0.284496725 : f32
    %251 = vector.broadcast %cst_46 : f32 to vector<16x16xf32>
    %252 = arith.addf %250, %251 : vector<16x16xf32>
    %253 = arith.mulf %252, %242 : vector<16x16xf32>
    %cst_47 = arith.constant 0.254829586 : f32
    %254 = vector.broadcast %cst_47 : f32 to vector<16x16xf32>
    %255 = arith.addf %253, %254 : vector<16x16xf32>
    %256 = arith.mulf %255, %242 : vector<16x16xf32>
    %cst_48 = arith.constant 0.000000e+00 : f32
    %257 = vector.broadcast %cst_48 : f32 to vector<16x16xf32>
    %258 = arith.subf %257, %236 : vector<16x16xf32>
    %259 = arith.mulf %258, %236 : vector<16x16xf32>
    %260 = math.exp %259 : vector<16x16xf32>
    %261 = arith.mulf %256, %260 : vector<16x16xf32>
    %cst_49 = arith.constant 1.000000e+00 : f32
    %262 = vector.broadcast %cst_49 : f32 to vector<16x16xf32>
    %263 = arith.subf %262, %261 : vector<16x16xf32>
    %cst_50 = arith.constant 0.000000e+00 : f32
    %264 = vector.broadcast %cst_50 : f32 to vector<16x16xf32>
    %265 = arith.cmpf olt, %235, %264 : vector<16x16xf32>
    %cst_51 = arith.constant 0.000000e+00 : f32
    %266 = vector.broadcast %cst_51 : f32 to vector<16x16xf32>
    %267 = arith.subf %266, %263 : vector<16x16xf32>
    %268 = arith.select %265, %267, %263 : vector<16x16xi1>, vector<16x16xf32>
    %cst_52 = arith.constant 1.000000e+00 : f32
    %269 = vector.broadcast %cst_52 : f32 to vector<16x16xf32>
    %270 = arith.addf %269, %268 : vector<16x16xf32>
    %271 = arith.mulf %233, %270 : vector<16x16xf32>
    %c0_53 = arith.constant 0 : index
    %c0_54 = arith.constant 0 : index
    %272 = vector.load %arg6[%c0_53, %c0_54] : memref<32x16xf32, #tpu.memory_space<vmem>>, vector<32x16xf32>
    %cst_55 = arith.constant dense<0.000000e+00> : vector<32x16xf32>
    %273 = tpu.matmul %272, %271, %cst_55 {dimension_numbers = #tpu.dot_dimension_numbers<[1], [0], [0], [1], [0, 0, 1, 1], [], []>} : vector<32x16xf32>, vector<16x16xf32>, vector<32x16xf32> -> vector<32x16xf32>
    %c0_56 = arith.constant 0 : index
    %c0_57 = arith.constant 0 : index
    %274 = vector.load %arg7[%c0_56, %c0_57] : memref<32x1xf32, #tpu.memory_space<vmem>>, vector<32x1xf32>
    %275 = vector.broadcast %274 : vector<32x1xf32> to vector<32x16xf32>
    %276 = arith.addf %273, %275 : vector<32x16xf32>
    %c0_58 = arith.constant 0 : index
    %c0_59 = arith.constant 0 : index
    %c0_60 = arith.constant 0 : index
    %277 = vector.load %arg8[%c0_58, %c0_59, %c0_60] : memref<1x32x16xf32, #tpu.memory_space<vmem>>, vector<1x32x16xf32>
    %278 = vector.shape_cast %277 : vector<1x32x16xf32> to vector<32x16xf32>
    %279 = vector.shape_cast %276 : vector<32x16xf32> to vector<1x32x16xf32>
    tpu.vector_store %arg8[%c0_58, %c0_59, %c0_60], %279 {strides = array<i32>} : memref<1x32x16xf32, #tpu.memory_space<vmem>>, vector<1x32x16xf32>,
    return
  }
  func.func @transform_0(%arg0: i32, %arg1: i32) -> (i32, i32, i32, i32) {
    %c0_i32 = arith.constant 0 : i32
    %c0_i32_0 = arith.constant 0 : i32
    %c0_i32_1 = arith.constant 0 : i32
    return %arg0, %c0_i32, %c0_i32_0, %arg1 : i32, i32, i32, i32
  }
  func.func @transform_1(%arg0: i32, %arg1: i32) -> (i32, i32) {
    %c0_i32 = arith.constant 0 : i32
    %c0_i32_0 = arith.constant 0 : i32
    %c0_i32_1 = arith.constant 0 : i32
    return %c0_i32, %c0_i32_0 : i32, i32
  }
  func.func @transform_2(%arg0: i32, %arg1: i32) -> (i32, i32) {
    %c0_i32 = arith.constant 0 : i32
    %c0_i32_0 = arith.constant 0 : i32
    %c0_i32_1 = arith.constant 0 : i32
    return %c0_i32, %c0_i32_0 : i32, i32
  }
  func.func @transform_3(%arg0: i32, %arg1: i32) -> (i32, i32) {
    %c0_i32 = arith.constant 0 : i32
    %c0_i32_0 = arith.constant 0 : i32
    %c0_i32_1 = arith.constant 0 : i32
    return %c0_i32, %c0_i32_0 : i32, i32
  }
  func.func @transform_4(%arg0: i32, %arg1: i32) -> (i32, i32) {
    %c0_i32 = arith.constant 0 : i32
    %c0_i32_0 = arith.constant 0 : i32
    %c0_i32_1 = arith.constant 0 : i32
    return %c0_i32, %c0_i32_0 : i32, i32
  }
  func.func @transform_5(%arg0: i32, %arg1: i32) -> (i32, i32) {
    %c0_i32 = arith.constant 0 : i32
    %c0_i32_0 = arith.constant 0 : i32
    %c0_i32_1 = arith.constant 0 : i32
    return %c0_i32, %c0_i32_0 : i32, i32
  }
  func.func @transform_6(%arg0: i32, %arg1: i32) -> (i32, i32, i32) {
    %c0_i32 = arith.constant 0 : i32
    %c0_i32_0 = arith.constant 0 : i32
    return %arg0, %c0_i32, %arg1 : i32, i32, i32
  }
}

</mosaic_0001>

<llo_original>
// kernel: tpu_custom_call.1
$region0: #{tpu_custom_call.1}
  #allocation0 [shape = 'u32[]', space=smem, size = 0x4, offset = 0x4, fixed_abs, tag = 'smem constant byte address 0x4 - core index']
  #allocation1 [shape = 'u32[72,128]{1,0:T(1,128)}', space=vmem, size = 0x9000, scoped, tag = 'internal scratch']
  %s0 = inlined_call_operand.vmem [shape: f32[2,3,8,16], index: 0, kind: input, shape index: {}]
  %s1 = inlined_call_operand.vmem [shape: f32[32,3], index: 1, kind: input, shape index: {}]
  %s2 = inlined_call_operand.vmem [shape: f32[16,32], index: 2, kind: input, shape index: {}]
  %s3 = inlined_call_operand.vmem [shape: f32[16,1], index: 3, kind: input, shape index: {}]
  %s4 = inlined_call_operand.vmem [shape: f32[32,16], index: 4, kind: input, shape index: {}]
  %s5 = inlined_call_operand.vmem [shape: f32[32,1], index: 5, kind: input, shape index: {}]
  %s6 = inlined_call_operand.vmem [shape: f32[2,32,16], index: 6, kind: output, shape index: {}]
  %s7 = sld [smem:[#allocation0]]
  $region57: #{tpu_custom_call.1} parent=0
    _
  %s9 = ssub.s32 1, %s7
  %s10 = scalar_select 0, %s9, %s7
  loop: start=0, step=1, limit=4
  $region2: #{tpu_custom_call.1} parent=0 // loop_pre_header
    _
  $region3: #{tpu_custom_call.1} parent=0 // loop_header
    %s12 = sphi 0, %s16
    %p13 = scmp.ge.s32.totalorder %s12, 4
    %s19 = sphi 0, %s31
    %s20 = sphi 0, %s27
    %s21 = sphi 0, %s19
    %s22 = sphi 0, %s20
    %s23 = sphi 0, %s21
    %s24 = sphi 0, %s22
    %s36 = sphi 0, %s38
    %s39 = sphi 0, %s36
    %s40 = sphi 0, %s39
    %s56 = sphi 0, %s40
    %s60 = sphi 0, %s60
    %s62 = sphi 0, %s60
    %s63 = sphi 0, %s62
    %s77 = sphi 0, %s63
    %s81 = sphi 0, %s81
    %s83 = sphi 0, %s81
    %s84 = sphi 0, %s83
    %s98 = sphi 0, %s84
    %s102 = sphi 0, %s102
    %s104 = sphi 0, %s102
    %s105 = sphi 0, %s104
    %s119 = sphi 0, %s105
    %s123 = sphi 0, %s123
    %s125 = sphi 0, %s123
    %s126 = sphi 0, %s125
    %s140 = sphi 0, %s126
    %s144 = sphi 0, %s144
    %s146 = sphi 0, %s144
    %s147 = sphi 0, %s146
    %s161 = sphi 0, %s147
    %s169 = sphi 0, %s171
    %s172 = sphi 0, %s169
    %s173 = sphi 0, %s172
    %s189 = sphi 0, %s173
  $region4: #{tpu_custom_call.1} parent=0 // loop_header_branch
    %15 = sbr.rel (%p13) target = $region8
  $region5: #{tpu_custom_call.1} parent=0 // loop_body
    %s17 = ssub.s32 %s12, 1
    %s18 = ssub.s32 %s12, 2
    %s25 = sadd.s32 1, %s20
    %p26 = scmp.ge.s32.totalorder %s25, 1
    %s27 = scalar_select %p26, 0, %s25
    %s28 = sadd.s32 1, %s19
    %s29 = scalar_select %p26, %s28, %s19
    %p30 = scmp.ge.s32.totalorder %s29, 2
    %s31 = scalar_select %p30, 0, %s29
    %s32 = ssub.s32 %s19, %s31
    %s33 = ssub.s32 %s20, %s27
    %s34 = sor.u32 %s32, %s33
    %p35 = scmp.eq.s32.totalorder %s34, 0
    %s37 = sadd.s32 %s36, 1
    %s38 = scalar_select %p35, %s36, %s37
    %p41 = pneg %p35
    %p42 = scmp.eq.s32.totalorder %s12, 1
    %p43 = por %p41, %p42
    %p44 = scmp.ne.s32.totalorder %s36, %s39
    %p45 = scmp.eq.s32.totalorder %s12, 0
    %p46 = por %p44, %p45
    %p47 = scmp.ne.s32.totalorder %s36, %s39
    %p48 = scmp.eq.s32.totalorder %s17, 1
    %p49 = por %p47, %p48
    %p50 = scmp.ne.s32.totalorder %s39, %s40
    %p51 = scmp.eq.s32.totalorder %s17, 0
    %p52 = por %p50, %p51
    %p53 = scmp.ne.s32.totalorder %s39, %s40
    %p54 = scmp.eq.s32.totalorder %s18, 1
    %p55 = por %p53, %p54
    %p57 = scmp.ne.s32.totalorder %s40, %s56
    %p58 = scmp.eq.s32.totalorder %s18, 0
    %p59 = por %p57, %p58
    %s61 = sadd.s32 %s60, 1
    %p64 = scmp.eq.s32.totalorder %s12, 1
    %p65 = scmp.ne.s32.totalorder %s60, %s62
    %p66 = scmp.eq.s32.totalorder %s12, 0
    %p67 = por %p65, %p66
    %p68 = scmp.ne.s32.totalorder %s60, %s62
    %p69 = scmp.eq.s32.totalorder %s17, 1
    %p70 = por %p68, %p69
    %p71 = scmp.ne.s32.totalorder %s62, %s63
    %p72 = scmp.eq.s32.totalorder %s17, 0
    %p73 = por %p71, %p72
    %p74 = scmp.ne.s32.totalorder %s62, %s63
    %p75 = scmp.eq.s32.totalorder %s18, 1
    %p76 = por %p74, %p75
    %p78 = scmp.ne.s32.totalorder %s63, %s77
    %p79 = scmp.eq.s32.totalorder %s18, 0
    %p80 = por %p78, %p79
    %s82 = sadd.s32 %s81, 1
    %p85 = scmp.eq.s32.totalorder %s12, 1
    %p86 = scmp.ne.s32.totalorder %s81, %s83
    %p87 = scmp.eq.s32.totalorder %s12, 0
    %p88 = por %p86, %p87
    %p89 = scmp.ne.s32.totalorder %s81, %s83
    %p90 = scmp.eq.s32.totalorder %s17, 1
    %p91 = por %p89, %p90
    %p92 = scmp.ne.s32.totalorder %s83, %s84
    %p93 = scmp.eq.s32.totalorder %s17, 0
    %p94 = por %p92, %p93
    %p95 = scmp.ne.s32.totalorder %s83, %s84
    %p96 = scmp.eq.s32.totalorder %s18, 1
    %p97 = por %p95, %p96
    %p99 = scmp.ne.s32.totalorder %s84, %s98
    %p100 = scmp.eq.s32.totalorder %s18, 0
    %p101 = por %p99, %p100
    %s103 = sadd.s32 %s102, 1
    %p106 = scmp.eq.s32.totalorder %s12, 1
    %p107 = scmp.ne.s32.totalorder %s102, %s104
    %p108 = scmp.eq.s32.totalorder %s12, 0
    %p109 = por %p107, %p108
    %p110 = scmp.ne.s32.totalorder %s102, %s104
    %p111 = scmp.eq.s32.totalorder %s17, 1
    %p112 = por %p110, %p111
    %p113 = scmp.ne.s32.totalorder %s104, %s105
    %p114 = scmp.eq.s32.totalorder %s17, 0
    %p115 = por %p113, %p114
    %p116 = scmp.ne.s32.totalorder %s104, %s105
    %p117 = scmp.eq.s32.totalorder %s18, 1
    %p118 = por %p116, %p117
    %p120 = scmp.ne.s32.totalorder %s105, %s119
    %p121 = scmp.eq.s32.totalorder %s18, 0
    %p122 = por %p120, %p121
    %s124 = sadd.s32 %s123, 1
    %p127 = scmp.eq.s32.totalorder %s12, 1
    %p128 = scmp.ne.s32.totalorder %s123, %s125
    %p129 = scmp.eq.s32.totalorder %s12, 0
    %p130 = por %p128, %p129
    %p131 = scmp.ne.s32.totalorder %s123, %s125
    %p132 = scmp.eq.s32.totalorder %s17, 1
    %p133 = por %p131, %p132
    %p134 = scmp.ne.s32.totalorder %s125, %s126
    %p135 = scmp.eq.s32.totalorder %s17, 0
    %p136 = por %p134, %p135
    %p137 = scmp.ne.s32.totalorder %s125, %s126
    %p138 = scmp.eq.s32.totalorder %s18, 1
    %p139 = por %p137, %p138
    %p141 = scmp.ne.s32.totalorder %s126, %s140
    %p142 = scmp.eq.s32.totalorder %s18, 0
    %p143 = por %p141, %p142
    %s145 = sadd.s32 %s144, 1
    %p148 = scmp.eq.s32.totalorder %s12, 1
    %p149 = scmp.ne.s32.totalorder %s144, %s146
    %p150 = scmp.eq.s32.totalorder %s12, 0
    %p151 = por %p149, %p150
    %p152 = scmp.ne.s32.totalorder %s144, %s146
    %p153 = scmp.eq.s32.totalorder %s17, 1
    %p154 = por %p152, %p153
    %p155 = scmp.ne.s32.totalorder %s146, %s147
    %p156 = scmp.eq.s32.totalorder %s17, 0
    %p157 = por %p155, %p156
    %p158 = scmp.ne.s32.totalorder %s146, %s147
    %p159 = scmp.eq.s32.totalorder %s18, 1
    %p160 = por %p158, %p159
    %p162 = scmp.ne.s32.totalorder %s147, %s161
    %p163 = scmp.eq.s32.totalorder %s18, 0
    %p164 = por %p162, %p163
    %s165 = ssub.s32 %s19, %s31
    %s166 = ssub.s32 %s20, %s27
    %s167 = sor.u32 %s165, %s166
    %p168 = scmp.eq.s32.totalorder %s167, 0
    %s170 = sadd.s32 %s169, 1
    %s171 = scalar_select %p168, %s169, %s170
    %p174 = pneg %p168
    %p175 = scmp.eq.s32.totalorder %s12, 1
    %p176 = por %p174, %p175
    %p177 = scmp.ne.s32.totalorder %s169, %s172
    %p178 = scmp.eq.s32.totalorder %s12, 0
    %p179 = por %p177, %p178
    %p180 = scmp.ne.s32.totalorder %s169, %s172
    %p181 = scmp.eq.s32.totalorder %s17, 1
    %p182 = por %p180, %p181
    %p183 = scmp.ne.s32.totalorder %s172, %s173
    %p184 = scmp.eq.s32.totalorder %s17, 0
    %p185 = por %p183, %p184
    %p186 = scmp.ne.s32.totalorder %s172, %s173
    %p187 = scmp.eq.s32.totalorder %s18, 1
    %p188 = por %p186, %p187
    %p190 = scmp.ne.s32.totalorder %s173, %s189
    %p191 = scmp.eq.s32.totalorder %s18, 0
    %p192 = por %p190, %p191
    %p193 = scmp.le.s32.totalorder 1, %s12
    %p194 = scmp.lt.s32.totalorder %s12, 3
    %p195 = pnand %p193, %p194
    %p196 = pneg %p195
    // Predicated region
    $region9: #{tpu_custom_call.1} parent=5 // pred_check
      _
    $region10: #{tpu_custom_call.1} parent=5 // pred_check_branch
      %198 = sbr.rel (%p195) target = $region12
    $region11: #{tpu_custom_call.1} parent=5 // pred_region
      %s199 = ssub.s32 %s12, 1
      // Predicated region
      $region13: #{tpu_custom_call.1} parent=11 // pred_check
        %p200 = pneg %p73
      $region14: #{tpu_custom_call.1} parent=11 // pred_check_branch
        %202 = sbr.rel (%p200) target = $region16
      $region15: #{tpu_custom_call.1} parent=11 // pred_region
        _
      $region16: #{tpu_custom_call.1} parent=11 // pred_fallthru
        _
      // Predicated region
      $region17: #{tpu_custom_call.1} parent=11 // pred_check
        %p203 = pneg %p94
      $region18: #{tpu_custom_call.1} parent=11 // pred_check_branch
        %205 = sbr.rel (%p203) target = $region20
      $region19: #{tpu_custom_call.1} parent=11 // pred_region
        _
      $region20: #{tpu_custom_call.1} parent=11 // pred_fallthru
        _
      // Predicated region
      $region21: #{tpu_custom_call.1} parent=11 // pred_check
        %p206 = pneg %p115
      $region22: #{tpu_custom_call.1} parent=11 // pred_check_branch
        %208 = sbr.rel (%p206) target = $region24
      $region23: #{tpu_custom_call.1} parent=11 // pred_region
        _
      $region24: #{tpu_custom_call.1} parent=11 // pred_fallthru
        _
      // Predicated region
      $region25: #{tpu_custom_call.1} parent=11 // pred_check
        %p209 = pneg %p136
      $region26: #{tpu_custom_call.1} parent=11 // pred_check_branch
        %211 = sbr.rel (%p209) target = $region28
      $region27: #{tpu_custom_call.1} parent=11 // pred_region
        _
      $region28: #{tpu_custom_call.1} parent=11 // pred_fallthru
        _
      // Predicated region
      $region29: #{tpu_custom_call.1} parent=11 // pred_check
        %p212 = pneg %p157
      $region30: #{tpu_custom_call.1} parent=11 // pred_check_branch
        %214 = sbr.rel (%p212) target = $region32
      $region31: #{tpu_custom_call.1} parent=11 // pred_region
        _
      $region32: #{tpu_custom_call.1} parent=11 // pred_fallthru
        _
    $region12: #{tpu_custom_call.1} parent=5 // pred_fallthru
      _
    %p215 = scmp.lt.s32.totalorder %s12, 2
    // Predicated region
    $region33: #{tpu_custom_call.1} parent=5 // pred_check
      %p216 = pneg %p215
    $region34: #{tpu_custom_call.1} parent=5 // pred_check_branch
      %218 = sbr.rel (%p216) target = $region36
    $region35: #{tpu_custom_call.1} parent=5 // pred_region
      // Predicated region
      $region37: #{tpu_custom_call.1} parent=35 // pred_check
        %p219 = pneg %p46
      $region38: #{tpu_custom_call.1} parent=35 // pred_check_branch
        %221 = sbr.rel (%p219) target = $region40
      $region39: #{tpu_custom_call.1} parent=35 // pred_region
        %p222 = scmp.lt.s32.totalorder %s19, 1
        %s223 = scalar_select %p222, %s19, 1
        %p224 = scmp.lt.s32.totalorder %s20, 0
        %s225 = scalar_select %p224, %s20, 0
        %s226 = smul.addr %s223, 3
        %s227 = sadd.s32 %s225, %s226
        %s228 = smul.addr %s227, 8
        %s229 = scalar_lea.vmem %s0, %s228
      $region40: #{tpu_custom_call.1} parent=35 // pred_fallthru
        _
    $region36: #{tpu_custom_call.1} parent=5 // pred_fallthru
      _
    %p230 = scmp.le.s32.totalorder 1, %s12
    %p231 = scmp.lt.s32.totalorder %s12, 3
    %p232 = pnand %p230, %p231
    %p233 = pneg %p232
    // Predicated region
    $region41: #{tpu_custom_call.1} parent=5 // pred_check
      _
    $region42: #{tpu_custom_call.1} parent=5 // pred_check_branch
      %235 = sbr.rel (%p232) target = $region44
    $region43: #{tpu_custom_call.1} parent=5 // pred_region
      %s236 = ssub.s32 %s12, 1
      %p237 = scmp.lt.s32.totalorder %s21, 1
      %s238 = scalar_select %p237, %s21, 1
      %p239 = scmp.lt.s32.totalorder %s22, 0
      %s240 = scalar_select %p239, %s22, 0
      %s241 = smul.addr %s238, 3
      %s242 = sadd.s32 %s240, %s241
      %s243 = smul.addr %s242, 8
      %s244 = scalar_lea.vmem %s0, %s243
      %p245 = pneg %p52
      %p246 = pneg %p49
      %p247 = pneg %p73
      %p248 = pneg %p70
      %p249 = pneg %p94
      %p250 = pneg %p91
      %p251 = pneg %p115
      %p252 = pneg %p112
      %p253 = pneg %p136
      %p254 = pneg %p133
      %p255 = pneg %p157
      %p256 = pneg %p154
      %p257 = pneg %p185
      %p258 = pneg %p182
      %p259 = scmp.lt.s32.totalorder %s21, 1
      %s260 = scalar_select %p259, %s21, 1
      %p261 = scmp.lt.s32.totalorder %s22, 0
      %s262 = scalar_select %p261, %s22, 0
      %s263 = smul.addr %s260, 4
      %s264 = sadd.s32 %s262, %s263
      %s265 = smul.addr %s264, 8
      %s266 = scalar_lea.vmem %s6, %s265
      %p267 = scmp.lt.s32.totalorder %s21, 1
      %s268 = scalar_select %p267, %s21, 1
      %p269 = scmp.lt.s32.totalorder %s22, 0
      %s270 = scalar_select %p269, %s22, 0
      %s271 = smul.addr %s268, 3
      %s272 = sadd.s32 %s270, %s271
      %s273 = smul.addr %s272, 8
      %s274 = scalar_lea.vmem %s0, %s273
      %p275 = scmp.lt.s32.totalorder %s21, 1
      %s276 = scalar_select %p275, %s21, 1
      %p277 = scmp.lt.s32.totalorder %s22, 0
      %s278 = scalar_select %p277, %s22, 0
      %s279 = smul.addr %s276, 4
      %s280 = sadd.s32 %s278, %s279
      %s281 = smul.addr %s280, 8
      %s282 = scalar_lea.vmem %s6, %s281
      %v283 = vld [vmem:[%s1] sm:$0xff]
      %v284 = vld [vmem:[%s1 + $0x8] sm:$0xff]
      %v285 = vld [vmem:[%s1 + $0x10] sm:$0xff]
      %v286 = vld [vmem:[%s1 + $0x18] sm:$0xff]
      %v287 = vld [vmem:[%s274] sm:$0x1]
      %v288 = vld [vmem:[%s274 + $0x8] sm:$0x1]
      %v289 = vld [vmem:[%s274 + $0x10] sm:$0x1]
      %v290 = vmul.f32 %v287, %v287
      %v291 = vmul.f32 %v288, %v288
      %v292 = vadd.f32 %v290, %v291
      %v293 = vmul.f32 %v289, %v289
      %v294 = vadd.f32 %v292, %v293
      %v295 = vmax.f32 %v294, 1e-24
      %v296 = vrsqrt.pop %v295
      %v297 = vmul.f32 %v296, %v295
      %v298 = vmul.f32 %v297, %v296
      %v299 = vmul.f32 0.5, %v298
      %v300 = vsub.f32 1.5, %v299
      %v301 = vmul.f32 %v296, %v300
      %vm302 = vweird.f32 %v295
      %vm303 = vweird.f32 %v296
      %vm304 = vmor %vm302, %vm303
      %v305 = vsel %vm304, %v296, %v301
      %v306 = vmul.f32 %v287, %v305
      %v307 = vmul.f32 %v288, %v305
      %v308 = vmul.f32 %v289, %v305
      %310 = vset.pattern.permute.xlu0 0
      %311 = vperm.xlu0 %310, %v283
      %v312 = vpop.permute.xlu0 %311
      %315 = vset.pattern.permute.xlu0 0
      %316 = vperm.xlu0 %315, %v284
      %v317 = vpop.permute.xlu0 %316
      %320 = vset.pattern.permute.xlu0 0
      %321 = vperm.xlu0 %320, %v285
      %v322 = vpop.permute.xlu0 %321
      %325 = vset.pattern.permute.xlu0 0
      %326 = vperm.xlu0 %325, %v286
      %v327 = vpop.permute.xlu0 %326
      %v329 = vperm.slane %v306, 0
      %v330 = vmul.f32 %v312, %v329
      %v331 = vmul.f32 %v317, %v329
      %v332 = vmul.f32 %v322, %v329
      %v333 = vmul.f32 %v327, %v329
      %334 = vset.pattern.permute.xlu0 1
      %335 = vperm.xlu0 %334, %v283
      %v336 = vpop.permute.xlu0 %335
      %338 = vset.pattern.permute.xlu0 1
      %339 = vperm.xlu0 %338, %v284
      %v340 = vpop.permute.xlu0 %339
      %342 = vset.pattern.permute.xlu0 1
      %343 = vperm.xlu0 %342, %v285
      %v344 = vpop.permute.xlu0 %343
      %346 = vset.pattern.permute.xlu0 1
      %347 = vperm.xlu0 %346, %v286
      %v348 = vpop.permute.xlu0 %347
      %v350 = vperm.slane %v307, 0
      %v351 = vmul.f32 %v336, %v350
      %v352 = vmul.f32 %v340, %v350
      %v353 = vmul.f32 %v344, %v350
      %v354 = vmul.f32 %v348, %v350
      %v355 = vadd.f32 %v330, %v351
      %v356 = vadd.f32 %v331, %v352
      %v357 = vadd.f32 %v332, %v353
      %v358 = vadd.f32 %v333, %v354
      %359 = vset.pattern.permute.xlu0 2
      %360 = vperm.xlu0 %359, %v283
      %v361 = vpop.permute.xlu0 %360
      %363 = vset.pattern.permute.xlu0 2
      %364 = vperm.xlu0 %363, %v284
      %v365 = vpop.permute.xlu0 %364
      %367 = vset.pattern.permute.xlu0 2
      %368 = vperm.xlu0 %367, %v285
      %v369 = vpop.permute.xlu0 %368
      %371 = vset.pattern.permute.xlu0 2
      %372 = vperm.xlu0 %371, %v286
      %v373 = vpop.permute.xlu0 %372
      %v375 = vperm.slane %v308, 0
      %v376 = vmul.f32 %v361, %v375
      %v377 = vmul.f32 %v365, %v375
      %v378 = vmul.f32 %v369, %v375
      %v379 = vmul.f32 %v373, %v375
      %v380 = vadd.f32 %v355, %v376
      %v381 = vadd.f32 %v356, %v377
      %v382 = vadd.f32 %v357, %v378
      %v383 = vadd.f32 %v358, %v379
      %v384 = vld [vmem:[%s274 + $0x1] sm:$0x1]
      %v385 = vld [vmem:[%s274 + $0x9] sm:$0x1]
      %v386 = vld [vmem:[%s274 + $0x11] sm:$0x1]
      %v387 = vmul.f32 %v384, %v384
      %v388 = vmul.f32 %v385, %v385
      %v389 = vadd.f32 %v387, %v388
      %v390 = vmul.f32 %v386, %v386
      %v391 = vadd.f32 %v389, %v390
      %v392 = vmax.f32 %v391, 1e-24
      %v393 = vrsqrt.pop %v392
      %v394 = vmul.f32 %v393, %v392
      %v395 = vmul.f32 %v394, %v393
      %v396 = vmul.f32 0.5, %v395
      %v397 = vsub.f32 1.5, %v396
      %v398 = vmul.f32 %v393, %v397
      %vm399 = vweird.f32 %v392
      %vm400 = vweird.f32 %v393
      %vm401 = vmor %vm399, %vm400
      %v402 = vsel %vm401, %v393, %v398
      %v403 = vmul.f32 %v384, %v402
      %v404 = vmul.f32 %v385, %v402
      %v405 = vmul.f32 %v386, %v402
      %v406 = vperm.slane %v403, 0
      %v407 = vmul.f32 %v312, %v406
      %v408 = vmul.f32 %v317, %v406
      %v409 = vmul.f32 %v322, %v406
      %v410 = vmul.f32 %v327, %v406
      %v411 = vperm.slane %v404, 0
      %v412 = vmul.f32 %v336, %v411
      %v413 = vmul.f32 %v340, %v411
      %v414 = vmul.f32 %v344, %v411
      %v415 = vmul.f32 %v348, %v411
      %v416 = vadd.f32 %v407, %v412
      %v417 = vadd.f32 %v408, %v413
      %v418 = vadd.f32 %v409, %v414
      %v419 = vadd.f32 %v410, %v415
      %v420 = vperm.slane %v405, 0
      %v421 = vmul.f32 %v361, %v420
      %v422 = vmul.f32 %v365, %v420
      %v423 = vmul.f32 %v369, %v420
      %v424 = vmul.f32 %v373, %v420
      %v425 = vadd.f32 %v416, %v421
      %v426 = vadd.f32 %v417, %v422
      %v427 = vadd.f32 %v418, %v423
      %v428 = vadd.f32 %v419, %v424
      %v429 = vmax.f32 %v380, %v425
      %v430 = vmax.f32 %v381, %v426
      %v431 = vmax.f32 %v382, %v427
      %v432 = vmax.f32 %v383, %v428
      %v433 = vld [vmem:[%s274 + $0x2] sm:$0x1]
      %v434 = vld [vmem:[%s274 + $0xa] sm:$0x1]
      %v435 = vld [vmem:[%s274 + $0x12] sm:$0x1]
      %v436 = vmul.f32 %v433, %v433
      %v437 = vmul.f32 %v434, %v434
      %v438 = vadd.f32 %v436, %v437
      %v439 = vmul.f32 %v435, %v435
      %v440 = vadd.f32 %v438, %v439
      %v441 = vmax.f32 %v440, 1e-24
      %v442 = vrsqrt.pop %v441
      %v443 = vmul.f32 %v442, %v441
      %v444 = vmul.f32 %v443, %v442
      %v445 = vmul.f32 0.5, %v444
      %v446 = vsub.f32 1.5, %v445
      %v447 = vmul.f32 %v442, %v446
      %vm448 = vweird.f32 %v441
      %vm449 = vweird.f32 %v442
      %vm450 = vmor %vm448, %vm449
      %v451 = vsel %vm450, %v442, %v447
      %v452 = vmul.f32 %v433, %v451
      %v453 = vmul.f32 %v434, %v451
      %v454 = vmul.f32 %v435, %v451
      %v455 = vperm.slane %v452, 0
      %v456 = vmul.f32 %v312, %v455
      %v457 = vmul.f32 %v317, %v455
      %v458 = vmul.f32 %v322, %v455
      %v459 = vmul.f32 %v327, %v455
      %v460 = vperm.slane %v453, 0
      %v461 = vmul.f32 %v336, %v460
      %v462 = vmul.f32 %v340, %v460
      %v463 = vmul.f32 %v344, %v460
      %v464 = vmul.f32 %v348, %v460
      %v465 = vadd.f32 %v456, %v461
      %v466 = vadd.f32 %v457, %v462
      %v467 = vadd.f32 %v458, %v463
      %v468 = vadd.f32 %v459, %v464
      %v469 = vperm.slane %v454, 0
      %v470 = vmul.f32 %v361, %v469
      %v471 = vmul.f32 %v365, %v469
      %v472 = vmul.f32 %v369, %v469
      %v473 = vmul.f32 %v373, %v469
      %v474 = vadd.f32 %v465, %v470
      %v475 = vadd.f32 %v466, %v471
      %v476 = vadd.f32 %v467, %v472
      %v477 = vadd.f32 %v468, %v473
      %v478 = vmax.f32 %v429, %v474
      %v479 = vmax.f32 %v430, %v475
      %v480 = vmax.f32 %v431, %v476
      %v481 = vmax.f32 %v432, %v477
      %v482 = vld [vmem:[%s274 + $0x3] sm:$0x1]
      %v483 = vld [vmem:[%s274 + $0xb] sm:$0x1]
      %v484 = vld [vmem:[%s274 + $0x13] sm:$0x1]
      %v485 = vmul.f32 %v482, %v482
      %v486 = vmul.f32 %v483, %v483
      %v487 = vadd.f32 %v485, %v486
      %v488 = vmul.f32 %v484, %v484
      %v489 = vadd.f32 %v487, %v488
      %v490 = vmax.f32 %v489, 1e-24
      %v491 = vrsqrt.pop %v490
      %v492 = vmul.f32 %v491, %v490
      %v493 = vmul.f32 %v492, %v491
      %v494 = vmul.f32 0.5, %v493
      %v495 = vsub.f32 1.5, %v494
      %v496 = vmul.f32 %v491, %v495
      %vm497 = vweird.f32 %v490
      %vm498 = vweird.f32 %v491
      %vm499 = vmor %vm497, %vm498
      %v500 = vsel %vm499, %v491, %v496
      %v501 = vmul.f32 %v482, %v500
      %v502 = vmul.f32 %v483, %v500
      %v503 = vmul.f32 %v484, %v500
      %v504 = vperm.slane %v501, 0
      %v505 = vmul.f32 %v312, %v504
      %v506 = vmul.f32 %v317, %v504
      %v507 = vmul.f32 %v322, %v504
      %v508 = vmul.f32 %v327, %v504
      %v509 = vperm.slane %v502, 0
      %v510 = vmul.f32 %v336, %v509
      %v511 = vmul.f32 %v340, %v509
      %v512 = vmul.f32 %v344, %v509
      %v513 = vmul.f32 %v348, %v509
      %v514 = vadd.f32 %v505, %v510
      %v515 = vadd.f32 %v506, %v511
      %v516 = vadd.f32 %v507, %v512
      %v517 = vadd.f32 %v508, %v513
      %v518 = vperm.slane %v503, 0
      %v519 = vmul.f32 %v361, %v518
      %v520 = vmul.f32 %v365, %v518
      %v521 = vmul.f32 %v369, %v518
      %v522 = vmul.f32 %v373, %v518
      %v523 = vadd.f32 %v514, %v519
      %v524 = vadd.f32 %v515, %v520
      %v525 = vadd.f32 %v516, %v521
      %v526 = vadd.f32 %v517, %v522
      %v527 = vmax.f32 %v478, %v523
      %v528 = vmax.f32 %v479, %v524
      %v529 = vmax.f32 %v480, %v525
      %v530 = vmax.f32 %v481, %v526
      %v531 = vld [vmem:[%s274 + $0x4] sm:$0x1]
      %v532 = vld [vmem:[%s274 + $0xc] sm:$0x1]
      %v533 = vld [vmem:[%s274 + $0x14] sm:$0x1]
      %v534 = vmul.f32 %v531, %v531
      %v535 = vmul.f32 %v532, %v532
      %v536 = vadd.f32 %v534, %v535
      %v537 = vmul.f32 %v533, %v533
      %v538 = vadd.f32 %v536, %v537
      %v539 = vmax.f32 %v538, 1e-24
      %v540 = vrsqrt.pop %v539
      %v541 = vmul.f32 %v540, %v539
      %v542 = vmul.f32 %v541, %v540
      %v543 = vmul.f32 0.5, %v542
      %v544 = vsub.f32 1.5, %v543
      %v545 = vmul.f32 %v540, %v544
      %vm546 = vweird.f32 %v539
      %vm547 = vweird.f32 %v540
      %vm548 = vmor %vm546, %vm547
      %v549 = vsel %vm548, %v540, %v545
      %v550 = vmul.f32 %v531, %v549
      %v551 = vmul.f32 %v532, %v549
      %v552 = vmul.f32 %v533, %v549
      %v553 = vperm.slane %v550, 0
      %v554 = vmul.f32 %v312, %v553
      %v555 = vmul.f32 %v317, %v553
      %v556 = vmul.f32 %v322, %v553
      %v557 = vmul.f32 %v327, %v553
      %v558 = vperm.slane %v551, 0
      %v559 = vmul.f32 %v336, %v558
      %v560 = vmul.f32 %v340, %v558
      %v561 = vmul.f32 %v344, %v558
      %v562 = vmul.f32 %v348, %v558
      %v563 = vadd.f32 %v554, %v559
      %v564 = vadd.f32 %v555, %v560
      %v565 = vadd.f32 %v556, %v561
      %v566 = vadd.f32 %v557, %v562
      %v567 = vperm.slane %v552, 0
      %v568 = vmul.f32 %v361, %v567
      %v569 = vmul.f32 %v365, %v567
      %v570 = vmul.f32 %v369, %v567
      %v571 = vmul.f32 %v373, %v567
      %v572 = vadd.f32 %v563, %v568
      %v573 = vadd.f32 %v564, %v569
      %v574 = vadd.f32 %v565, %v570
      %v575 = vadd.f32 %v566, %v571
      %v576 = vmax.f32 %v527, %v572
      %v577 = vmax.f32 %v528, %v573
      %v578 = vmax.f32 %v529, %v574
      %v579 = vmax.f32 %v530, %v575
      %v580 = vld [vmem:[%s274 + $0x5] sm:$0x1]
      %v581 = vld [vmem:[%s274 + $0xd] sm:$0x1]
      %v582 = vld [vmem:[%s274 + $0x15] sm:$0x1]
      %v583 = vmul.f32 %v580, %v580
      %v584 = vmul.f32 %v581, %v581
      %v585 = vadd.f32 %v583, %v584
      %v586 = vmul.f32 %v582, %v582
      %v587 = vadd.f32 %v585, %v586
      %v588 = vmax.f32 %v587, 1e-24
      %v589 = vrsqrt.pop %v588
      %v590 = vmul.f32 %v589, %v588
      %v591 = vmul.f32 %v590, %v589
      %v592 = vmul.f32 0.5, %v591
      %v593 = vsub.f32 1.5, %v592
      %v594 = vmul.f32 %v589, %v593
      %vm595 = vweird.f32 %v588
      %vm596 = vweird.f32 %v589
      %vm597 = vmor %vm595, %vm596
      %v598 = vsel %vm597, %v589, %v594
      %v599 = vmul.f32 %v580, %v598
      %v600 = vmul.f32 %v581, %v598
      %v601 = vmul.f32 %v582, %v598
      %v602 = vperm.slane %v599, 0
      %v603 = vmul.f32 %v312, %v602
      %v604 = vmul.f32 %v317, %v602
      %v605 = vmul.f32 %v322, %v602
      %v606 = vmul.f32 %v327, %v602
      %v607 = vperm.slane %v600, 0
      %v608 = vmul.f32 %v336, %v607
      %v609 = vmul.f32 %v340, %v607
      %v610 = vmul.f32 %v344, %v607
      %v611 = vmul.f32 %v348, %v607
      %v612 = vadd.f32 %v603, %v608
      %v613 = vadd.f32 %v604, %v609
      %v614 = vadd.f32 %v605, %v610
      %v615 = vadd.f32 %v606, %v611
      %v616 = vperm.slane %v601, 0
      %v617 = vmul.f32 %v361, %v616
      %v618 = vmul.f32 %v365, %v616
      %v619 = vmul.f32 %v369, %v616
      %v620 = vmul.f32 %v373, %v616
      %v621 = vadd.f32 %v612, %v617
      %v622 = vadd.f32 %v613, %v618
      %v623 = vadd.f32 %v614, %v619
      %v624 = vadd.f32 %v615, %v620
      %v625 = vmax.f32 %v576, %v621
      %v626 = vmax.f32 %v577, %v622
      %v627 = vmax.f32 %v578, %v623
      %v628 = vmax.f32 %v579, %v624
      %v629 = vld [vmem:[%s274 + $0x6] sm:$0x1]
      %v630 = vld [vmem:[%s274 + $0xe] sm:$0x1]
      %v631 = vld [vmem:[%s274 + $0x16] sm:$0x1]
      %v632 = vmul.f32 %v629, %v629
      %v633 = vmul.f32 %v630, %v630
      %v634 = vadd.f32 %v632, %v633
      %v635 = vmul.f32 %v631, %v631
      %v636 = vadd.f32 %v634, %v635
      %v637 = vmax.f32 %v636, 1e-24
      %v638 = vrsqrt.pop %v637
      %v639 = vmul.f32 %v638, %v637
      %v640 = vmul.f32 %v639, %v638
      %v641 = vmul.f32 0.5, %v640
      %v642 = vsub.f32 1.5, %v641
      %v643 = vmul.f32 %v638, %v642
      %vm644 = vweird.f32 %v637
      %vm645 = vweird.f32 %v638
      %vm646 = vmor %vm644, %vm645
      %v647 = vsel %vm646, %v638, %v643
      %v648 = vmul.f32 %v629, %v647
      %v649 = vmul.f32 %v630, %v647
      %v650 = vmul.f32 %v631, %v647
      %v651 = vperm.slane %v648, 0
      %v652 = vmul.f32 %v312, %v651
      %v653 = vmul.f32 %v317, %v651
      %v654 = vmul.f32 %v322, %v651
      %v655 = vmul.f32 %v327, %v651
      %v656 = vperm.slane %v649, 0
      %v657 = vmul.f32 %v336, %v656
      %v658 = vmul.f32 %v340, %v656
      %v659 = vmul.f32 %v344, %v656
      %v660 = vmul.f32 %v348, %v656
      %v661 = vadd.f32 %v652, %v657
      %v662 = vadd.f32 %v653, %v658
      %v663 = vadd.f32 %v654, %v659
      %v664 = vadd.f32 %v655, %v660
      %v665 = vperm.slane %v650, 0
      %v666 = vmul.f32 %v361, %v665
      %v667 = vmul.f32 %v365, %v665
      %v668 = vmul.f32 %v369, %v665
      %v669 = vmul.f32 %v373, %v665
      %v670 = vadd.f32 %v661, %v666
      %v671 = vadd.f32 %v662, %v667
      %v672 = vadd.f32 %v663, %v668
      %v673 = vadd.f32 %v664, %v669
      %v674 = vmax.f32 %v625, %v670
      %v675 = vmax.f32 %v626, %v671
      %v676 = vmax.f32 %v627, %v672
      %v677 = vmax.f32 %v628, %v673
      %v678 = vld [vmem:[%s274 + $0x7] sm:$0x1]
      %v679 = vld [vmem:[%s274 + $0xf] sm:$0x1]
      %v680 = vld [vmem:[%s274 + $0x17] sm:$0x1]
      %v681 = vmul.f32 %v678, %v678
      %v682 = vmul.f32 %v679, %v679
      %v683 = vadd.f32 %v681, %v682
      %v684 = vmul.f32 %v680, %v680
      %v685 = vadd.f32 %v683, %v684
      %v686 = vmax.f32 %v685, 1e-24
      %v687 = vrsqrt.pop %v686
      %v688 = vmul.f32 %v687, %v686
      %v689 = vmul.f32 %v688, %v687
      %v690 = vmul.f32 0.5, %v689
      %v691 = vsub.f32 1.5, %v690
      %v692 = vmul.f32 %v687, %v691
      %vm693 = vweird.f32 %v686
      %vm694 = vweird.f32 %v687
      %vm695 = vmor %vm693, %vm694
      %v696 = vsel %vm695, %v687, %v692
      %v697 = vmul.f32 %v678, %v696
      %v698 = vmul.f32 %v679, %v696
      %v699 = vmul.f32 %v680, %v696
      %v700 = vperm.slane %v697, 0
      %v701 = vmul.f32 %v312, %v700
      %v702 = vmul.f32 %v317, %v700
      %v703 = vmul.f32 %v322, %v700
      %v704 = vmul.f32 %v327, %v700
      %v705 = vperm.slane %v698, 0
      %v706 = vmul.f32 %v336, %v705
      %v707 = vmul.f32 %v340, %v705
      %v708 = vmul.f32 %v344, %v705
      %v709 = vmul.f32 %v348, %v705
      %v710 = vadd.f32 %v701, %v706
      %v711 = vadd.f32 %v702, %v707
      %v712 = vadd.f32 %v703, %v708
      %v713 = vadd.f32 %v704, %v709
      %v714 = vperm.slane %v699, 0
      %v715 = vmul.f32 %v361, %v714
      %v716 = vmul.f32 %v365, %v714
      %v717 = vmul.f32 %v369, %v714
      %v718 = vmul.f32 %v373, %v714
      %v719 = vadd.f32 %v710, %v715
      %v720 = vadd.f32 %v711, %v716
      %v721 = vadd.f32 %v712, %v717
      %v722 = vadd.f32 %v713, %v718
      %v723 = vmax.f32 %v674, %v719
      %v724 = vmax.f32 %v675, %v720
      %v725 = vmax.f32 %v676, %v721
      %v726 = vmax.f32 %v677, %v722
      %v727 = vld [vmem:[%s2] sm:$0xff]
      %v728 = vld [vmem:[%s2 + $0x8] sm:$0xff]
      %v729 = vld [vmem:[%s3] sm:$0xff]
      %v730 = vld [vmem:[%s3 + $0x8] sm:$0xff]
      %732 = vset.pattern.permute.xlu0 0
      %733 = vperm.xlu0 %732, %v729
      %v734 = vpop.permute.xlu0 %733
      %737 = vset.pattern.permute.xlu0 0
      %738 = vperm.xlu0 %737, %v730
      %v739 = vpop.permute.xlu0 %738
      %vm741 = vcmask 261120
      %v743 = vsel %vm741, %v727, 0
      %v746 = vsel %vm741, %v728, 0
      %748 = vmatpush.msra.mxu0 0.0
      %749 = vmatpush.msra.mxu0 0.0
      %750 = vmatpush.msra.mxu0 0.0
      %751 = vmatpush.msra.mxu0 0.0
      %752 = vmatpush.msra.mxu0 0.0
      %753 = vmatpush.msra.mxu0 0.0
      %754 = vmatpush.msra.mxu0 0.0
      %755 = vmatpush.msra.mxu0 0.0
      %756 = vmatpush.msra.mxu0 0.0
      %757 = vmatpush.msra.mxu0 0.0
      %758 = vmatpush.msra.mxu0 0.0
      %759 = vmatpush.msra.mxu0 0.0
      %760 = vmatpush.msra.mxu0 %v726
      %761 = vmatpush.msra.mxu0 %v725
      %762 = vmatpush.msra.mxu0 %v724
      %763 = vmatpush.msra.mxu0 %v723
      %764 = vmatmul.f32.gmra.mxu0 %v743
      %v765 = vpop.f32.mrf.mxu0
      %v766 = vadd.f32 %v734, %v765
      %767 = vmatmul.f32.gmra.mxu0 %v746
      %v768 = vpop.f32.mrf.mxu0
      %v769 = vadd.f32 %v739, %v768
      %770 = vdwg.mxu0
      %v771 = vmul.f32 %v766, 0.5
      %v772 = vmul.f32 %v769, 0.5
      %v773 = vmul.f32 %v766, 0.70710677
      %v774 = vmul.f32 %v769, 0.70710677
      %v775 = vand.u32 2147483647, %v773
      %v776 = vand.u32 2147483647, %v774
      %v777 = vmul.f32 %v775, 0.3275911
      %v778 = vmul.f32 %v776, 0.3275911
      %v779 = vadd.f32 %v777, 1.0
      %v780 = vadd.f32 %v778, 1.0
      %v781 = vrcp.pop %v779
      %v782 = vmul.f32 %v779, %v781
      %v783 = vsub.f32 1.0, %v782
      %v784 = vmul.f32 %v781, %v783
      %v785 = vadd.f32 %v781, %v784
      %vm786 = vweird.f32 %v779
      %vm787 = vweird.f32 %v781
      %vm788 = vmor %vm786, %vm787
      %v789 = vsel %vm788, %v781, %v785
      %v790 = vand.u32 2147483647, %v779
      %vm791 = vcmp.eq.f32.partialorder %v790, 8.507059e+37
      %v792 = vand.u32 %v779, 2147483648
      %v793 = vor.u32 1.1754944e-38, %v792
      %v794 = vsel %vm791, %v793, %v789
      %v795 = vmul.f32 1.0, %v794
      %v796 = vrcp.pop %v780
      %v797 = vmul.f32 %v780, %v796
      %v798 = vsub.f32 1.0, %v797
      %v799 = vmul.f32 %v796, %v798
      %v800 = vadd.f32 %v796, %v799
      %vm801 = vweird.f32 %v780
      %vm802 = vweird.f32 %v796
      %vm803 = vmor %vm801, %vm802
      %v804 = vsel %vm803, %v796, %v800
      %v805 = vand.u32 2147483647, %v780
      %vm806 = vcmp.eq.f32.partialorder %v805, 8.507059e+37
      %v807 = vand.u32 %v780, 2147483648
      %v808 = vor.u32 1.1754944e-38, %v807
      %v809 = vsel %vm806, %v808, %v804
      %v810 = vmul.f32 1.0, %v809
      %v811 = vmul.f32 %v795, 1.0614054
      %v812 = vmul.f32 %v810, 1.0614054
      %v813 = vadd.f32 %v811, -1.4531521
      %v814 = vadd.f32 %v812, -1.4531521
      %v815 = vmul.f32 %v813, %v795
      %v816 = vmul.f32 %v814, %v810
      %v817 = vadd.f32 %v815, 1.4214138
      %v818 = vadd.f32 %v816, 1.4214138
      %v819 = vmul.f32 %v817, %v795
      %v820 = vmul.f32 %v818, %v810
      %v821 = vadd.f32 %v819, -0.28449672
      %v822 = vadd.f32 %v820, -0.28449672
      %v823 = vmul.f32 %v821, %v795
      %v824 = vmul.f32 %v822, %v810
      %v825 = vadd.f32 %v823, 0.2548296
      %v826 = vadd.f32 %v824, 0.2548296
      %v827 = vmul.f32 %v825, %v795
      %v828 = vmul.f32 %v826, %v810
      %v829 = vsub.f32 0.0, %v775
      %v830 = vsub.f32 0.0, %v776
      %v831 = vmul.f32 %v829, %v775
      %v832 = vmul.f32 %v830, %v776
      %v833 = vmul.f32 %v831, 1.442695
      %v834 = vpow.pop %v833
      %v835 = vmul.f32 %v832, 1.442695
      %v836 = vpow.pop %v835
      %v837 = vmul.f32 %v827, %v834
      %v838 = vmul.f32 %v828, %v836
      %v839 = vsub.f32 1.0, %v837
      %v840 = vsub.f32 1.0, %v838
      %vm841 = vcmp.lt.f32.partialorder %v773, 0.0
      %vm842 = vcmp.lt.f32.partialorder %v774, 0.0
      %v843 = vsub.f32 0.0, %v839
      %v844 = vsub.f32 0.0, %v840
      %v845 = vsel %vm841, %v843, %v839
      %v846 = vsel %vm842, %v844, %v840
      %v847 = vadd.f32 %v845, 1.0
      %v848 = vadd.f32 %v846, 1.0
      %v849 = vmul.f32 %v771, %v847
      %v850 = vmul.f32 %v772, %v848
      %v851 = vld [vmem:[%s4] sm:$0xff]
      %v852 = vld [vmem:[%s4 + $0x8] sm:$0xff]
      %v853 = vld [vmem:[%s4 + $0x10] sm:$0xff]
      %v854 = vld [vmem:[%s4 + $0x18] sm:$0xff]
      %v855 = vld [vmem:[%s5] sm:$0xff]
      %v856 = vld [vmem:[%s5 + $0x8] sm:$0xff]
      %v857 = vld [vmem:[%s5 + $0x10] sm:$0xff]
      %v858 = vld [vmem:[%s5 + $0x18] sm:$0xff]
      %860 = vset.pattern.permute.xlu0 0
      %861 = vperm.xlu0 %860, %v855
      %v862 = vpop.permute.xlu0 %861
      %865 = vset.pattern.permute.xlu0 0
      %866 = vperm.xlu0 %865, %v856
      %v867 = vpop.permute.xlu0 %866
      %870 = vset.pattern.permute.xlu0 0
      %871 = vperm.xlu0 %870, %v857
      %v872 = vpop.permute.xlu0 %871
      %875 = vset.pattern.permute.xlu0 0
      %876 = vperm.xlu0 %875, %v858
      %v877 = vpop.permute.xlu0 %876
      %vm879 = vcmask 130048
      %v881 = vsel %vm879, %v851, 0
      %v884 = vsel %vm879, %v852, 0
      %v887 = vsel %vm879, %v853, 0
      %v890 = vsel %vm879, %v854, 0
      %892 = vmatpush.msra.mxu0 0.0
      %893 = vmatpush.msra.mxu0 0.0
      %894 = vmatpush.msra.mxu0 0.0
      %895 = vmatpush.msra.mxu0 0.0
      %896 = vmatpush.msra.mxu0 0.0
      %897 = vmatpush.msra.mxu0 0.0
      %898 = vmatpush.msra.mxu0 0.0
      %899 = vmatpush.msra.mxu0 0.0
      %900 = vmatpush.msra.mxu0 0.0
      %901 = vmatpush.msra.mxu0 0.0
      %902 = vmatpush.msra.mxu0 0.0
      %903 = vmatpush.msra.mxu0 0.0
      %904 = vmatpush.msra.mxu0 0.0
      %905 = vmatpush.msra.mxu0 0.0
      %906 = vmatpush.msra.mxu0 %v850
      %907 = vmatpush.msra.mxu0 %v849
      %908 = vmatmul.f32.gmra.mxu0 %v881
      %v909 = vpop.f32.mrf.mxu0
      %v910 = vadd.f32 %v862, %v909
      %911 = vmatmul.f32.gmra.mxu0 %v884
      %v912 = vpop.f32.mrf.mxu0
      %v913 = vadd.f32 %v867, %v912
      %914 = vmatmul.f32.gmra.mxu0 %v887
      %v915 = vpop.f32.mrf.mxu0
      %v916 = vadd.f32 %v872, %v915
      %917 = vmatmul.f32.gmra.mxu0 %v890
      %v918 = vpop.f32.mrf.mxu0
      %v919 = vadd.f32 %v877, %v918
      %920 = vdwg.mxu0
      %921 = vst.msk [vmem:[%s282] sm:$0xff] %vm879, %v910
      %922 = vst.msk [vmem:[%s282 + $0x8] sm:$0xff] %vm879, %v913
      %923 = vst.msk [vmem:[%s282 + $0x10] sm:$0xff] %vm879, %v916
      %924 = vst.msk [vmem:[%s282 + $0x18] sm:$0xff] %vm879, %v919
      %p925 = scmp.lt.s32.totalorder %s21, 1
      %s926 = scalar_select %p925, %s21, 1
      %p927 = scmp.lt.s32.totalorder %s22, 0
      %s928 = scalar_select %p927, %s22, 0
      %s929 = smul.addr %s926, 4
      %s930 = sadd.s32 %s928, %s929
      %s931 = smul.addr %s930, 8
      %s932 = scalar_lea.vmem %s6, %s931
      // Predicated region
      $region45: #{tpu_custom_call.1} parent=43 // pred_check
        %p933 = pneg %p182
      $region46: #{tpu_custom_call.1} parent=43 // pred_check_branch
        %935 = sbr.rel (%p933) target = $region48
      $region47: #{tpu_custom_call.1} parent=43 // pred_region
        _
      $region48: #{tpu_custom_call.1} parent=43 // pred_fallthru
        _
    $region44: #{tpu_custom_call.1} parent=5 // pred_fallthru
      _
    %p936 = scmp.le.s32.totalorder 2, %s12
    // Predicated region
    $region49: #{tpu_custom_call.1} parent=5 // pred_check
      %p937 = pneg %p936
    $region50: #{tpu_custom_call.1} parent=5 // pred_check_branch
      %939 = sbr.rel (%p937) target = $region52
    $region51: #{tpu_custom_call.1} parent=5 // pred_region
      %s940 = ssub.s32 %s12, 2
      // Predicated region
      $region53: #{tpu_custom_call.1} parent=51 // pred_check
        %p941 = pneg %p188
      $region54: #{tpu_custom_call.1} parent=51 // pred_check_branch
        %943 = sbr.rel (%p941) target = $region56
      $region55: #{tpu_custom_call.1} parent=51 // pred_region
        %p944 = scmp.lt.s32.totalorder %s23, 1
        %s945 = scalar_select %p944, %s23, 1
        %p946 = scmp.lt.s32.totalorder %s24, 0
        %s947 = scalar_select %p946, %s24, 0
        %s948 = smul.addr %s945, 4
        %s949 = sadd.s32 %s947, %s948
        %s950 = smul.addr %s949, 8
        %s951 = scalar_lea.vmem %s6, %s950
      $region56: #{tpu_custom_call.1} parent=51 // pred_fallthru
        _
    $region52: #{tpu_custom_call.1} parent=5 // pred_fallthru
      _
  $region6: #{tpu_custom_call.1} parent=0 // loop_footer
    %s16 = sadd.s32 1, %s12
  $region7: #{tpu_custom_call.1} parent=0 // loop_footer_branch
    %11 = sbr.rel target = $region3
  $region8: #{tpu_custom_call.1} parent=0 // loop_exit
    _

</llo_original>
